<compile_context>
chip_gen: v5e
topology: v5e:2x2
jax: 0.10.0
libtpu: 0.0.40
codegen_flags: <defaults>
</compile_context>

<pallas_src>
import jax
import jax.numpy as jnp
from jax.experimental import pallas as pl
from jax.experimental.pallas import tpu as pltpu

EPS = 1e-5  # nn.BatchNorm2d default eps


def _round_up(x, m):
    return ((x + m - 1) // m) * m


# ---------------------------------- kernel ----------------------------------


def _make_kernel(n, h, w, cin, c):
    """Kernel body with all shape constants closed over (channel-major)."""
    oh1, ow1 = h - 2, w - 2          # conv1 output grid (also the common M grid)
    oh, ow = h - 4, w - 4            # conv2 / downsample output grid
    m1 = n * oh1 * ow1               # columns of every (C, M) intermediate
    m2 = n * oh * ow                 # number of valid (interior) columns
    inv_m2 = 1.0 / float(m2)

    def kernel(p1_ref, pd_ref, mask_ref, w1_ref, wd_ref, w2_ref,
               g1_ref, b1_ref, g2_ref, b2_ref, o_ref, ybuf_ref):
        # ---- conv1: (C, 9*cin) @ (9*cin, M1) -> (C, M1), lane-dense ----
        y1 = jnp.dot(w1_ref[...], p1_ref[...],
                     preferred_element_type=jnp.float32)

        # ---- BN1 (training-mode batch stats) as lane reductions + affine ----
        mean1 = jnp.mean(y1, axis=1, keepdims=True)            # (C, 1)
        d1 = y1 - mean1
        var1 = jnp.mean(d1 * d1, axis=1, keepdims=True)         # centered form
        scale1 = g1_ref[...] * jax.lax.rsqrt(var1 + EPS)        # (C, 1)
        shift1 = b1_ref[...] - mean1 * scale1
        y1 = y1 * scale1 + shift1                               # (C, M1)

        # ---- stage y1 into a zero-tailed scratch so every conv2 tap is a
        #      plain lane-offset slice (no reshapes, no lane concats) ----
        ybuf_ref[...] = jnp.zeros(ybuf_ref.shape, jnp.float32)
        ybuf_ref[:, 0:m1] = y1
        yb = ybuf_ref[...]                                      # (C, m1_pad)

        # ---- conv2 im2col: sublane-concat of 9 shifted lane-dense copies ----
        taps = []
        for dy in range(3):
            for dx in range(3):
                off = dy * ow1 + dx
                taps.append(yb[:, off:off + m1])                # (C, M1)
        p2 = jnp.concatenate(taps, axis=0)                      # (9*C, M1)

        # ---- conv2: (C, 9*C) @ (9*C, M1) -> (C, M1) ----
        y2 = jnp.dot(w2_ref[...], p2, preferred_element_type=jnp.float32)

        # ---- BN2: masked batch stats over the M2 valid interior columns ----
        mask = mask_ref[...]                                    # (1, M1), 0/1
        mean2 = jnp.sum(y2 * mask, axis=1, keepdims=True) * inv_m2
        d2 = (y2 - mean2) * mask
        var2 = jnp.sum(d2 * d2, axis=1, keepdims=True) * inv_m2
        scale2 = g2_ref[...] * jax.lax.rsqrt(var2 + EPS)
        shift2 = b2_ref[...] - mean2 * scale2
        y2 = y2 * scale2 + shift2                               # (C, M1)

        # ---- identity branch (placeholder 5x5 valid conv, see TODO) ----
        ident = jnp.dot(wd_ref[...], pd_ref[...],
                        preferred_element_type=jnp.float32)     # (C, M1)

        # ---- residual add + ReLU; lane-dense (C, M1) store ----
        o_ref[...] = jnp.maximum(y2 + ident, 0.0)

    return kernel


# --------------------------------- wrapper ----------------------------------


def block1834_forward(x_nchw, params):
    """x_nchw: (N, Cin, H, W) f32. Returns (N, C, H-4, W-4) f32 (NCHW)."""
    w1, g1, b1, w2, g2, b2, wd = params   # HWIO conv weights, (C,) BN vectors
    n, cin, h, w = x_nchw.shape
    c = w1.shape[-1]
    oh1, ow1 = h - 2, w - 2
    oh, ow = h - 4, w - 4
    m1 = n * oh1 * ow1

    f32 = jnp.float32
    # channel-first copy of x; with cin == 1 this is essentially a reshape.
    x_cf = jnp.transpose(x_nchw, (1, 0, 2, 3)).astype(f32)      # (cin, N, H, W)

    # --- wrapper-side (XLA) im2col for the two x-only patch matrices ---
    def im2col_rows(kh, kw, oh_, ow_):
        """(kh*kw*cin, M1) patch matrix, rows ordered (dy, dx, ci); taps whose
        output grid is smaller than (oh1, ow1) are zero-padded onto it."""
        rows = []
        for dy in range(kh):
            for dx in range(kw):
                tap = x_cf[:, :, dy:dy + oh_, dx:dx + ow_]       # (cin,N,oh_,ow_)
                if (oh_, ow_) != (oh1, ow1):
                    tap = jnp.pad(tap, ((0, 0), (0, 0),
                                        (0, oh1 - oh_), (0, ow1 - ow_)))
                rows.append(tap.reshape(cin, m1))
        return jnp.concatenate(rows, axis=0)

    p1 = im2col_rows(3, 3, oh1, ow1)                             # (9*cin, M1)
    pd = im2col_rows(5, 5, oh, ow)                               # (25*cin, M1)
    mask = jnp.pad(jnp.ones((n, oh, ow), f32),
                   ((0, 0), (0, oh1 - oh), (0, ow1 - ow))).reshape(1, m1)

    # --- transposed, matmul-ready weights and (C, 1) BN columns ---
    w1t = w1.reshape(9 * cin, c).astype(f32).T                   # (C, 9*cin)
    wdt = wd.reshape(25 * cin, c).astype(f32).T                  # (C, 25*cin)
    w2t = w2.reshape(9 * c, c).astype(f32).T                     # (C, 9*C)
    g1c = g1.reshape(c, 1).astype(f32)
    b1c = b1.reshape(c, 1).astype(f32)
    g2c = g2.reshape(c, 1).astype(f32)
    b2c = b2.reshape(c, 1).astype(f32)

    # scratch wide enough for the largest tap offset (2*ow1 + 2), lane-aligned.
    m1_pad = _round_up(m1 + 2 * ow1 + 2, 128)

    vmem = pl.BlockSpec(memory_space=pltpu.MemorySpace.VMEM)
    out_cm = pl.pallas_call(
        _make_kernel(n, h, w, cin, c),
        out_shape=jax.ShapeDtypeStruct((c, m1), jnp.float32),
        in_specs=[vmem] * 10,
        out_specs=vmem,
        scratch_shapes=[pltpu.VMEM((c, m1_pad), jnp.float32)],
    )(p1, pd, mask, w1t, wdt, w2t, g1c, b1c, g2c, b2c)

    # (C, M1) slab on the 10x10 grid -> crop valid interior -> NCHW.
    out = out_cm.reshape(c, n, oh1, ow1)[:, :, :oh, :ow]
    return jnp.transpose(out, (1, 0, 2, 3))


# ---------------------- independent pure-JAX reference -----------------------


def _reference(x_nchw, params):
    w1, g1, b1, w2, g2, b2, wd = params

    def conv(x, w_hwio):
        return jax.lax.conv_general_dilated(
            x.astype(jnp.float32), w_hwio.astype(jnp.float32),
            window_strides=(1, 1), padding="VALID",
            dimension_numbers=("NCHW", "HWIO", "NCHW"))

    def bn(x, g, b):
        mean = jnp.mean(x, axis=(0, 2, 3), keepdims=True)
        var = jnp.mean(jnp.square(x - mean), axis=(0, 2, 3), keepdims=True)
        xn = (x - mean) * jax.lax.rsqrt(var + EPS)
        return xn * g.reshape(1, -1, 1, 1) + b.reshape(1, -1, 1, 1)

    y = bn(conv(x_nchw, w1), g1, b1)
    y = bn(conv(y, w2), g2, b2)
    ident = conv(x_nchw, wd)
    return jnp.maximum(y + ident, 0.0)


# ----------------------------------- main ------------------------------------

if __name__ == "__main__":
    # Shapes consistent with the module: in_channels = 1 (module global),
    # intermediate_channels = 8, batch = 2, spatial = 12.
    N, CIN, CINT, H, W = 2, 1, 8, 12, 12

    key = jax.random.PRNGKey(0)
    kx, k1, k2, kd, kg1, kb1, kg2, kb2 = jax.random.split(key, 8)

    x = jax.random.normal(kx, (N, CIN, H, W), jnp.float32)

    # Deterministic parameter init (conv weights stored HWIO).
    w1 = jax.random.normal(k1, (3, 3, CIN, CINT), jnp.float32) * 0.2    # cv1
    w2 = jax.random.normal(k2, (3, 3, CINT, CINT), jnp.float32) * 0.2   # cv2
    wd = jax.random.normal(kd, (5, 5, CIN, CINT), jnp.float32) * 0.2    # downsample
    g1 = jax.random.uniform(kg1, (CINT,), jnp.float32, 0.5, 1.5)        # bn1 weight
    b1 = jax.random.normal(kb1, (CINT,), jnp.float32) * 0.1             # bn1 bias
    g2 = jax.random.uniform(kg2, (CINT,), jnp.float32, 0.5, 1.5)        # bn2 weight
    b2 = jax.random.normal(kb2, (CINT,), jnp.float32) * 0.1             # bn2 bias

    params = (w1, g1, b1, w2, g2, b2, wd)

    out = jax.block_until_ready(block1834_forward(x, params))
    ref = jax.block_until_ready(_reference(x, params))

    assert out.shape == (N, CINT, H - 4, W - 4), out.shape
    assert jnp.allclose(out, ref, rtol=1e-3, atol=1e-3), "mismatch vs reference"

    print("KERNEL_OK")
</pallas_src>

<mosaic_0001>
module attributes {stable_mosaic.version = 11 : i64} {
  func.func @kernel(%arg0: memref<9x200xf32, #tpu.memory_space<vmem>>, %arg1: memref<25x200xf32, #tpu.memory_space<vmem>>, %arg2: memref<1x200xf32, #tpu.memory_space<vmem>>, %arg3: memref<8x9xf32, #tpu.memory_space<vmem>>, %arg4: memref<8x25xf32, #tpu.memory_space<vmem>>, %arg5: memref<8x72xf32, #tpu.memory_space<vmem>>, %arg6: memref<8x1xf32, #tpu.memory_space<vmem>>, %arg7: memref<8x1xf32, #tpu.memory_space<vmem>>, %arg8: memref<8x1xf32, #tpu.memory_space<vmem>>, %arg9: memref<8x1xf32, #tpu.memory_space<vmem>>, %arg10: memref<8x200xf32, #tpu.memory_space<vmem>>, %arg11: memref<8x256xf32, #tpu.memory_space<vmem>>) attributes {dimension_semantics = [], scalar_prefetch = 0 : i64, scratch_operands = 1 : i64, tpu.core_type = #tpu.core_type<tc>} {
    %c0 = arith.constant 0 : index
    %c0_0 = arith.constant 0 : index
    %0 = vector.load %arg3[%c0, %c0_0] : memref<8x9xf32, #tpu.memory_space<vmem>>, vector<8x9xf32>
    %c0_1 = arith.constant 0 : index
    %c0_2 = arith.constant 0 : index
    %1 = vector.load %arg0[%c0_1, %c0_2] : memref<9x200xf32, #tpu.memory_space<vmem>>, vector<9x200xf32>
    %cst = arith.constant dense<0.000000e+00> : vector<8x200xf32>
    %2 = tpu.matmul %0, %1, %cst {dimension_numbers = #tpu.dot_dimension_numbers<[1], [0], [0], [1], [0, 0, 1, 1], [], []>} : vector<8x9xf32>, vector<9x200xf32>, vector<8x200xf32> -> vector<8x200xf32>
    %cst_3 = arith.constant dense<0.000000e+00> : vector<8xf32>
    %3 = vector.multi_reduction <add>, %2, %cst_3 [1] : vector<8x200xf32> to vector<8xf32>
    %4 = vector.shape_cast %3 : vector<8xf32> to vector<8x1xf32>
    %cst_4 = arith.constant 2.000000e+02 : f32
    %5 = vector.broadcast %cst_4 : f32 to vector<8x1xf32>
    %6 = arith.divf %4, %5 : vector<8x1xf32>
    %7 = vector.broadcast %6 : vector<8x1xf32> to vector<8x200xf32>
    %8 = arith.subf %2, %7 : vector<8x200xf32>
    %9 = arith.mulf %8, %8 : vector<8x200xf32>
    %cst_5 = arith.constant dense<0.000000e+00> : vector<8xf32>
    %10 = vector.multi_reduction <add>, %9, %cst_5 [1] : vector<8x200xf32> to vector<8xf32>
    %11 = vector.shape_cast %10 : vector<8xf32> to vector<8x1xf32>
    %cst_6 = arith.constant 2.000000e+02 : f32
    %12 = vector.broadcast %cst_6 : f32 to vector<8x1xf32>
    %13 = arith.divf %11, %12 : vector<8x1xf32>
    %c0_7 = arith.constant 0 : index
    %c0_8 = arith.constant 0 : index
    %14 = vector.load %arg6[%c0_7, %c0_8] : memref<8x1xf32, #tpu.memory_space<vmem>>, vector<8x1xf32>
    %cst_9 = arith.constant 9.99999974E-6 : f32
    %15 = vector.broadcast %cst_9 : f32 to vector<8x1xf32>
    %16 = arith.addf %13, %15 : vector<8x1xf32>
    %17 = math.rsqrt %16 : vector<8x1xf32>
    %18 = arith.mulf %14, %17 : vector<8x1xf32>
    %c0_10 = arith.constant 0 : index
    %c0_11 = arith.constant 0 : index
    %19 = vector.load %arg7[%c0_10, %c0_11] : memref<8x1xf32, #tpu.memory_space<vmem>>, vector<8x1xf32>
    %20 = arith.mulf %6, %18 : vector<8x1xf32>
    %21 = arith.subf %19, %20 : vector<8x1xf32>
    %22 = vector.broadcast %18 : vector<8x1xf32> to vector<8x200xf32>
    %23 = arith.mulf %2, %22 : vector<8x200xf32>
    %24 = vector.broadcast %21 : vector<8x1xf32> to vector<8x200xf32>
    %25 = arith.addf %23, %24 : vector<8x200xf32>
    %cst_12 = arith.constant 0.000000e+00 : f32
    %26 = vector.broadcast %cst_12 : f32 to vector<8x256xf32>
    %c0_13 = arith.constant 0 : index
    %c0_14 = arith.constant 0 : index
    %27 = vector.load %arg11[%c0_13, %c0_14] : memref<8x256xf32, #tpu.memory_space<vmem>>, vector<8x256xf32>
    tpu.vector_store %arg11[%c0_13, %c0_14], %26 {strides = array<i32>} : memref<8x256xf32, #tpu.memory_space<vmem>>, vector<8x256xf32>,
    %c0_15 = arith.constant 0 : index
    %c0_16 = arith.constant 0 : index
    %28 = vector.load %arg11[%c0_15, %c0_16] : memref<8x256xf32, #tpu.memory_space<vmem>>, vector<8x200xf32>
    tpu.vector_store %arg11[%c0_15, %c0_16], %25 {strides = array<i32>} : memref<8x256xf32, #tpu.memory_space<vmem>>, vector<8x200xf32>,
    %c0_17 = arith.constant 0 : index
    %c0_18 = arith.constant 0 : index
    %29 = vector.load %arg11[%c0_17, %c0_18] : memref<8x256xf32, #tpu.memory_space<vmem>>, vector<8x256xf32>
    %30 = vector.extract_strided_slice %29 {offsets = [0, 0], sizes = [8, 200], strides = [1, 1]} : vector<8x256xf32> to vector<8x200xf32>
    %31 = vector.extract_strided_slice %29 {offsets = [0, 1], sizes = [8, 200], strides = [1, 1]} : vector<8x256xf32> to vector<8x200xf32>
    %32 = vector.extract_strided_slice %29 {offsets = [0, 2], sizes = [8, 200], strides = [1, 1]} : vector<8x256xf32> to vector<8x200xf32>
    %33 = vector.extract_strided_slice %29 {offsets = [0, 10], sizes = [8, 200], strides = [1, 1]} : vector<8x256xf32> to vector<8x200xf32>
    %34 = vector.extract_strided_slice %29 {offsets = [0, 11], sizes = [8, 200], strides = [1, 1]} : vector<8x256xf32> to vector<8x200xf32>
    %35 = vector.extract_strided_slice %29 {offsets = [0, 12], sizes = [8, 200], strides = [1, 1]} : vector<8x256xf32> to vector<8x200xf32>
    %36 = vector.extract_strided_slice %29 {offsets = [0, 20], sizes = [8, 200], strides = [1, 1]} : vector<8x256xf32> to vector<8x200xf32>
    %37 = vector.extract_strided_slice %29 {offsets = [0, 21], sizes = [8, 200], strides = [1, 1]} : vector<8x256xf32> to vector<8x200xf32>
    %38 = vector.extract_strided_slice %29 {offsets = [0, 22], sizes = [8, 200], strides = [1, 1]} : vector<8x256xf32> to vector<8x200xf32>
    %39 = tpu.concatenate %30, %31, %32, %33, %34, %35, %36, %37, %38 in 0 : vector<8x200xf32>, vector<8x200xf32>, vector<8x200xf32>, vector<8x200xf32>, vector<8x200xf32>, vector<8x200xf32>, vector<8x200xf32>, vector<8x200xf32>, vector<8x200xf32> -> vector<72x200xf32>
    %c0_19 = arith.constant 0 : index
    %c0_20 = arith.constant 0 : index
    %40 = vector.load %arg5[%c0_19, %c0_20] : memref<8x72xf32, #tpu.memory_space<vmem>>, vector<8x72xf32>
    %cst_21 = arith.constant dense<0.000000e+00> : vector<8x200xf32>
    %41 = tpu.matmul %40, %39, %cst_21 {dimension_numbers = #tpu.dot_dimension_numbers<[1], [0], [0], [1], [0, 0, 1, 1], [], []>} : vector<8x72xf32>, vector<72x200xf32>, vector<8x200xf32> -> vector<8x200xf32>
    %c0_22 = arith.constant 0 : index
    %c0_23 = arith.constant 0 : index
    %42 = vector.load %arg2[%c0_22, %c0_23] : memref<1x200xf32, #tpu.memory_space<vmem>>, vector<1x200xf32>
    %43 = vector.broadcast %42 : vector<1x200xf32> to vector<8x200xf32>
    %44 = arith.mulf %41, %43 : vector<8x200xf32>
    %cst_24 = arith.constant dense<0.000000e+00> : vector<8xf32>
    %45 = vector.multi_reduction <add>, %44, %cst_24 [1] : vector<8x200xf32> to vector<8xf32>
    %46 = vector.shape_cast %45 : vector<8xf32> to vector<8x1xf32>
    %cst_25 = arith.constant 7.812500e-03 : f32
    %47 = vector.broadcast %cst_25 : f32 to vector<8x1xf32>
    %48 = arith.mulf %46, %47 : vector<8x1xf32>
    %49 = vector.broadcast %48 : vector<8x1xf32> to vector<8x200xf32>
    %50 = arith.subf %41, %49 : vector<8x200xf32>
    %51 = vector.broadcast %42 : vector<1x200xf32> to vector<8x200xf32>
    %52 = arith.mulf %50, %51 : vector<8x200xf32>
    %53 = arith.mulf %52, %52 : vector<8x200xf32>
    %cst_26 = arith.constant dense<0.000000e+00> : vector<8xf32>
    %54 = vector.multi_reduction <add>, %53, %cst_26 [1] : vector<8x200xf32> to vector<8xf32>
    %55 = vector.shape_cast %54 : vector<8xf32> to vector<8x1xf32>
    %cst_27 = arith.constant 7.812500e-03 : f32
    %56 = vector.broadcast %cst_27 : f32 to vector<8x1xf32>
    %57 = arith.mulf %55, %56 : vector<8x1xf32>
    %c0_28 = arith.constant 0 : index
    %c0_29 = arith.constant 0 : index
    %58 = vector.load %arg8[%c0_28, %c0_29] : memref<8x1xf32, #tpu.memory_space<vmem>>, vector<8x1xf32>
    %cst_30 = arith.constant 9.99999974E-6 : f32
    %59 = vector.broadcast %cst_30 : f32 to vector<8x1xf32>
    %60 = arith.addf %57, %59 : vector<8x1xf32>
    %61 = math.rsqrt %60 : vector<8x1xf32>
    %62 = arith.mulf %58, %61 : vector<8x1xf32>
    %c0_31 = arith.constant 0 : index
    %c0_32 = arith.constant 0 : index
    %63 = vector.load %arg9[%c0_31, %c0_32] : memref<8x1xf32, #tpu.memory_space<vmem>>, vector<8x1xf32>
    %64 = arith.mulf %48, %62 : vector<8x1xf32>
    %65 = arith.subf %63, %64 : vector<8x1xf32>
    %66 = vector.broadcast %62 : vector<8x1xf32> to vector<8x200xf32>
    %67 = arith.mulf %41, %66 : vector<8x200xf32>
    %68 = vector.broadcast %65 : vector<8x1xf32> to vector<8x200xf32>
    %69 = arith.addf %67, %68 : vector<8x200xf32>
    %c0_33 = arith.constant 0 : index
    %c0_34 = arith.constant 0 : index
    %70 = vector.load %arg4[%c0_33, %c0_34] : memref<8x25xf32, #tpu.memory_space<vmem>>, vector<8x25xf32>
    %c0_35 = arith.constant 0 : index
    %c0_36 = arith.constant 0 : index
    %71 = vector.load %arg1[%c0_35, %c0_36] : memref<25x200xf32, #tpu.memory_space<vmem>>, vector<25x200xf32>
    %cst_37 = arith.constant dense<0.000000e+00> : vector<8x200xf32>
    %72 = tpu.matmul %70, %71, %cst_37 {dimension_numbers = #tpu.dot_dimension_numbers<[1], [0], [0], [1], [0, 0, 1, 1], [], []>} : vector<8x25xf32>, vector<25x200xf32>, vector<8x200xf32> -> vector<8x200xf32>
    %73 = arith.addf %69, %72 : vector<8x200xf32>
    %cst_38 = arith.constant 0.000000e+00 : f32
    %74 = vector.broadcast %cst_38 : f32 to vector<8x200xf32>
    %75 = arith.maximumf %73, %74 : vector<8x200xf32>
    %c0_39 = arith.constant 0 : index
    %c0_40 = arith.constant 0 : index
    %76 = vector.load %arg10[%c0_39, %c0_40] : memref<8x200xf32, #tpu.memory_space<vmem>>, vector<8x200xf32>
    tpu.vector_store %arg10[%c0_39, %c0_40], %75 {strides = array<i32>} : memref<8x200xf32, #tpu.memory_space<vmem>>, vector<8x200xf32>,
    return
  }
}

</mosaic_0001>

<llo_original>
// kernel: tpu_custom_call.1
$region0: #{tpu_custom_call.1}
  #allocation0 [shape = 'u32[]', space=smem, size = 0x4, offset = 0x4, fixed_abs, tag = 'smem constant byte address 0x4 - core index']
  #allocation1 [shape = 'u32[72,128]{1,0:T(1,128)}', space=vmem, size = 0x9000, scoped, tag = 'internal scratch']
  #allocation2 [shape = 'f32[8,256]{1,0:T(8,128)}', space=vmem, size = 0x2000, scoped, tag = 'scratch operand']
  %s0 = inlined_call_operand.hbm [shape: f32[9,200], index: 0, kind: input, shape index: {}]
  %s1 = inlined_call_operand.hbm [shape: f32[25,200], index: 1, kind: input, shape index: {}]
  %s2 = inlined_call_operand.vmem [shape: f32[1,200], index: 2, kind: input, shape index: {}]
  %s3 = inlined_call_operand.vmem [shape: f32[8,9], index: 3, kind: input, shape index: {}]
  %s4 = inlined_call_operand.vmem [shape: f32[8,25], index: 4, kind: input, shape index: {}]
  %s5 = inlined_call_operand.vmem [shape: f32[8,72], index: 5, kind: input, shape index: {}]
  %s6 = inlined_call_operand.vmem [shape: f32[8,1], index: 6, kind: input, shape index: {}]
  %s7 = inlined_call_operand.vmem [shape: f32[8,1], index: 7, kind: input, shape index: {}]
  %s8 = inlined_call_operand.vmem [shape: f32[8,1], index: 8, kind: input, shape index: {}]
  %s9 = inlined_call_operand.vmem [shape: f32[8,1], index: 9, kind: input, shape index: {}]
  %s10 = inlined_call_operand.hbm [shape: f32[8,200], index: 10, kind: output, shape index: {}]
  %s11 = sld [smem:[#allocation0]]
  $region58: #{tpu_custom_call.1} parent=0
    _
  %s13 = ssub.s32 1, %s11
  %s14 = scalar_select 0, %s13, %s11
  $region1: #{tpu_custom_call.1} parent=0
    #allocation3 [shape = 'u8[16384]{0}', space=vmem, size = 0x4000, scoped, tag = 'input window, operand 0, single buffered']
    #allocation4 [shape = 's32[1]{0}', space=sflag, size = 0x4, scoped, tag = 'scoped memory for tpu_custom_call.1']
    #allocation5 [shape = 's32[1]{0}', space=sflag, size = 0x4, scoped, tag = 'scoped memory for tpu_custom_call.1']
    #allocation6 [shape = 'u8[32768]{0}', space=vmem, size = 0x8000, scoped, tag = 'input window, operand 1, single buffered']
    #allocation7 [shape = 's32[1]{0}', space=sflag, size = 0x4, scoped, tag = 'scoped memory for tpu_custom_call.1']
    #allocation8 [shape = 'u8[8192]{0}', space=vmem, size = 0x2000, scoped, tag = 'output window, operand 0, single buffered']
    %15 = vsyncpa [#allocation4], 0
    %16 = vsyncpa [#allocation7], 0
    %17 = vsyncpa [#allocation5], 0
    // Predicated region
    $region2: #{tpu_custom_call.1} parent=1 // pred_check
      _
    $region3: #{tpu_custom_call.1} parent=1 // pred_check_branch
      %19 = sbr.rel (0) target = $region5
    $region4: #{tpu_custom_call.1} parent=1 // pred_region
      %21 = vsyncadd [#allocation4], 0
      %s22 = sshll.u32 %s0, 4
      %s23 = int_to_ptr.hbm [resolvable:$true] %s22
      %s24 = sshll.u32 [#allocation3], 4
      %s25 = int_to_ptr.vmem [resolvable:$true] %s24
      %30 = dma.hbm_to_vmem [thread:$0]  %s23, 512, %s25, [#allocation4], 256, 256, 16
    $region5: #{tpu_custom_call.1} parent=1 // pred_fallthru
      _
    // Predicated region
    $region6: #{tpu_custom_call.1} parent=1 // pred_check
      _
    $region7: #{tpu_custom_call.1} parent=1 // pred_check_branch
      %32 = sbr.rel (0) target = $region9
    $region8: #{tpu_custom_call.1} parent=1 // pred_region
      %34 = vsyncadd [#allocation7], 0
      %s35 = sshll.u32 %s1, 4
      %s36 = int_to_ptr.hbm [resolvable:$true] %s35
      %s37 = sshll.u32 [#allocation6], 4
      %s38 = int_to_ptr.vmem [resolvable:$true] %s37
      %43 = dma.hbm_to_vmem [thread:$0]  %s36, 1024, %s38, [#allocation7], 256, 256, 16
    $region9: #{tpu_custom_call.1} parent=1 // pred_fallthru
      _
    // Predicated region
    $region10: #{tpu_custom_call.1} parent=1 // pred_check
      _
    $region11: #{tpu_custom_call.1} parent=1 // pred_check_branch
      %45 = sbr.rel (0) target = $region13
    $region12: #{tpu_custom_call.1} parent=1 // pred_region
      _
    $region13: #{tpu_custom_call.1} parent=1 // pred_fallthru
      _
    // Predicated region
    $region14: #{tpu_custom_call.1} parent=1 // pred_check
      _
    $region15: #{tpu_custom_call.1} parent=1 // pred_check_branch
      %47 = sbr.rel (0) target = $region17
    $region16: #{tpu_custom_call.1} parent=1 // pred_region
      _
    $region17: #{tpu_custom_call.1} parent=1 // pred_fallthru
      _
    // Predicated region
    $region18: #{tpu_custom_call.1} parent=1 // pred_check
      _
    $region19: #{tpu_custom_call.1} parent=1 // pred_check_branch
      %49 = sbr.rel (0) target = $region21
    $region20: #{tpu_custom_call.1} parent=1 // pred_region
      _
    $region21: #{tpu_custom_call.1} parent=1 // pred_fallthru
      _
    // Predicated region
    $region22: #{tpu_custom_call.1} parent=1 // pred_check
      _
    $region23: #{tpu_custom_call.1} parent=1 // pred_check_branch
      %51 = sbr.rel (0) target = $region25
    $region24: #{tpu_custom_call.1} parent=1 // pred_region
      _
    $region25: #{tpu_custom_call.1} parent=1 // pred_fallthru
      _
    // Predicated region
    $region26: #{tpu_custom_call.1} parent=1 // pred_check
      _
    $region27: #{tpu_custom_call.1} parent=1 // pred_check_branch
      %53 = sbr.rel (0) target = $region29
    $region28: #{tpu_custom_call.1} parent=1 // pred_region
      _
    $region29: #{tpu_custom_call.1} parent=1 // pred_fallthru
      _
    // Predicated region
    $region30: #{tpu_custom_call.1} parent=1 // pred_check
      _
    $region31: #{tpu_custom_call.1} parent=1 // pred_check_branch
      %55 = sbr.rel (0) target = $region33
    $region32: #{tpu_custom_call.1} parent=1 // pred_region
      _
    $region33: #{tpu_custom_call.1} parent=1 // pred_fallthru
      _
    // Predicated region
    $region34: #{tpu_custom_call.1} parent=1 // pred_check
      _
    $region35: #{tpu_custom_call.1} parent=1 // pred_check_branch
      %57 = sbr.rel (0) target = $region37
    $region36: #{tpu_custom_call.1} parent=1 // pred_region
      _
    $region37: #{tpu_custom_call.1} parent=1 // pred_fallthru
      _
    // Predicated region
    $region38: #{tpu_custom_call.1} parent=1 // pred_check
      _
    $region39: #{tpu_custom_call.1} parent=1 // pred_check_branch
      %59 = sbr.rel (0) target = $region41
    $region40: #{tpu_custom_call.1} parent=1 // pred_region
      _
    $region41: #{tpu_custom_call.1} parent=1 // pred_fallthru
      _
    // Predicated region
    $region42: #{tpu_custom_call.1} parent=1 // pred_check
      _
    $region43: #{tpu_custom_call.1} parent=1 // pred_check_branch
      %61 = sbr.rel (0) target = $region45
    $region44: #{tpu_custom_call.1} parent=1 // pred_region
      %63 = dma.done [#allocation4], 512
    $region45: #{tpu_custom_call.1} parent=1 // pred_fallthru
      _
    // Predicated region
    $region46: #{tpu_custom_call.1} parent=1 // pred_check
      _
    $region47: #{tpu_custom_call.1} parent=1 // pred_check_branch
      %65 = sbr.rel (0) target = $region49
    $region48: #{tpu_custom_call.1} parent=1 // pred_region
      %67 = dma.done [#allocation7], 1024
    $region49: #{tpu_custom_call.1} parent=1 // pred_fallthru
      _
    %v68 = vld [vmem:[%s3] sm:$0xff]
    %v69 = vld [vmem:[#allocation3] sm:$0xff]
    %v70 = vld [vmem:[#allocation3 + $0x8] sm:$0xff]
    %v71 = vld [vmem:[#allocation3 + $0x10] sm:$0x1]
    %v72 = vld [vmem:[#allocation3 + $0x18] sm:$0x1]
    %vm73 = vcmask 72704
    %v75 = vsel %vm73, %v68, 0
    %vm77 = vcmask 1040384
    %v79 = vsel %vm77, %v71, 0
    %v82 = vsel %vm77, %v72, 0
    %84 = vmatpush.msra.mxu0 0.0
    %85 = vmatpush.msra.mxu0 0.0
    %86 = vmatpush.msra.mxu0 0.0
    %87 = vmatpush.msra.mxu0 0.0
    %88 = vmatpush.msra.mxu0 0.0
    %89 = vmatpush.msra.mxu0 0.0
    %90 = vmatpush.msra.mxu0 0.0
    %91 = vmatpush.msra.mxu0 0.0
    %92 = vmatpush.msra.mxu0 0.0
    %93 = vmatpush.msra.mxu0 0.0
    %94 = vmatpush.msra.mxu0 0.0
    %95 = vmatpush.msra.mxu0 0.0
    %96 = vmatpush.msra.mxu0 0.0
    %97 = vmatpush.msra.mxu0 0.0
    %98 = vmatpush.msra.mxu0 %v79
    %99 = vmatpush.msra.mxu0 %v69
    %100 = vmatmul.f32.gmra.mxu0 %v75
    %v101 = vpop.f32.mrf.mxu0
    %v102 = vadd.f32 0.0, %v101
    %103 = vdwg.mxu0
    %104 = vmatpush.msra.mxu0 0.0
    %105 = vmatpush.msra.mxu0 0.0
    %106 = vmatpush.msra.mxu0 0.0
    %107 = vmatpush.msra.mxu0 0.0
    %108 = vmatpush.msra.mxu0 0.0
    %109 = vmatpush.msra.mxu0 0.0
    %110 = vmatpush.msra.mxu0 0.0
    %111 = vmatpush.msra.mxu0 0.0
    %112 = vmatpush.msra.mxu0 0.0
    %113 = vmatpush.msra.mxu0 0.0
    %114 = vmatpush.msra.mxu0 0.0
    %115 = vmatpush.msra.mxu0 0.0
    %116 = vmatpush.msra.mxu0 0.0
    %117 = vmatpush.msra.mxu0 0.0
    %118 = vmatpush.msra.mxu0 %v82
    %119 = vmatpush.msra.mxu0 %v70
    %120 = vmatmul.f32.gmra.mxu0 %v75
    %v121 = vpop.f32.mrf.mxu0
    %v122 = vadd.f32 0.0, %v121
    %123 = vdwg.mxu0
    %vm124 = vcmask 588800
    %v125 = vsel %vm124, %v122, 0.0
    %v126 = vadd.f32 %v102, %v125
    %127 = vadd.xlane.f32.xlu0 %v126
    %v128 = vpop.xlane.xlu0 %127
    %v129 = vrcp.pop 200.0
    %v130 = vmul.f32 200.0, %v129
    %v131 = vsub.f32 1.0, %v130
    %v132 = vmul.f32 %v129, %v131
    %v133 = vadd.f32 %v129, %v132
    %vm134 = vweird.f32 %v129
    %v135 = vsel %vm134, %v129, %v133
    %v136 = vmul.f32 %v128, %v135
    %v137 = vsub.f32 %v102, %v136
    %v138 = vsub.f32 %v122, %v136
    %v139 = vmul.f32 %v137, %v137
    %v140 = vmul.f32 %v138, %v138
    %v141 = vsel %vm124, %v140, 0.0
    %v142 = vadd.f32 %v139, %v141
    %143 = vadd.xlane.f32.xlu0 %v142
    %v144 = vpop.xlane.xlu0 %143
    %v145 = vmul.f32 %v144, %v135
    %v146 = vld [vmem:[%s6] sm:$0xff]
    %v147 = vadd.f32 %v145, 1e-05
    %v148 = vrsqrt.pop %v147
    %v149 = vmul.f32 %v148, %v147
    %v150 = vmul.f32 %v149, %v148
    %v151 = vmul.f32 0.5, %v150
    %v152 = vsub.f32 1.5, %v151
    %v153 = vmul.f32 %v148, %v152
    %vm154 = vweird.f32 %v147
    %vm155 = vweird.f32 %v148
    %vm156 = vmor %vm154, %vm155
    %v157 = vsel %vm156, %v148, %v153
    %v158 = vmul.f32 %v146, %v157
    %v159 = vld [vmem:[%s7] sm:$0xff]
    %v160 = vmul.f32 %v136, %v158
    %v161 = vsub.f32 %v159, %v160
    %163 = vset.pattern.permute.xlu0 0
    %164 = vperm.xlu0 %163, %v158
    %v165 = vpop.permute.xlu0 %164
    %v167 = vmul.f32 %v102, %v165
    %v168 = vmul.f32 %v122, %v165
    %170 = vset.pattern.permute.xlu0 0
    %171 = vperm.xlu0 %170, %v161
    %v172 = vpop.permute.xlu0 %171
    %v174 = vadd.f32 %v167, %v172
    %v175 = vadd.f32 %v168, %v172
    %176 = vst [vmem:[#allocation2] sm:$0xff] 0.0
    %177 = vst [vmem:[#allocation2 + $0x8] sm:$0xff] 0.0
    %178 = vst [vmem:[#allocation2] sm:$0xff] %v174
    %179 = vst.msk [vmem:[#allocation2 + $0x8] sm:$0xff] %vm124, %v175
    %v180 = vld [vmem:[#allocation2] sm:$0xff]
    %v181 = vld [vmem:[#allocation2 + $0x8] sm:$0xff]
    %184 = vrot.lane.b32.xlu0 %v180, 127
    %v185 = vpop.permute.xlu0 %184
    %186 = vrot.lane.b32.xlu0 %v181, 127
    %v187 = vpop.permute.xlu0 %186
    %vm188 = vcmask 1039360
    %v189 = vsel %vm188, %v185, %v187
    %192 = vrot.lane.b32.xlu0 %v180, 126
    %v193 = vpop.permute.xlu0 %192
    %194 = vrot.lane.b32.xlu0 %v181, 126
    %v195 = vpop.permute.xlu0 %194
    %vm196 = vcmask 1031168
    %v197 = vsel %vm196, %v193, %v195
    %200 = vrot.lane.b32.xlu0 %v180, 118
    %v201 = vpop.permute.xlu0 %200
    %202 = vrot.lane.b32.xlu0 %v181, 118
    %v203 = vpop.permute.xlu0 %202
    %vm204 = vcmask 965632
    %v205 = vsel %vm204, %v201, %v203
    %208 = vrot.lane.b32.xlu0 %v180, 117
    %v209 = vpop.permute.xlu0 %208
    %210 = vrot.lane.b32.xlu0 %v181, 117
    %v211 = vpop.permute.xlu0 %210
    %vm212 = vcmask 957440
    %v213 = vsel %vm212, %v209, %v211
    %216 = vrot.lane.b32.xlu0 %v180, 116
    %v217 = vpop.permute.xlu0 %216
    %218 = vrot.lane.b32.xlu0 %v181, 116
    %v219 = vpop.permute.xlu0 %218
    %vm220 = vcmask 949248
    %v221 = vsel %vm220, %v217, %v219
    %224 = vrot.lane.b32.xlu0 %v180, 108
    %v225 = vpop.permute.xlu0 %224
    %226 = vrot.lane.b32.xlu0 %v181, 108
    %v227 = vpop.permute.xlu0 %226
    %vm228 = vcmask 883712
    %v229 = vsel %vm228, %v225, %v227
    %232 = vrot.lane.b32.xlu0 %v180, 107
    %v233 = vpop.permute.xlu0 %232
    %234 = vrot.lane.b32.xlu0 %v181, 107
    %v235 = vpop.permute.xlu0 %234
    %vm236 = vcmask 875520
    %v237 = vsel %vm236, %v233, %v235
    %240 = vrot.lane.b32.xlu0 %v180, 106
    %v241 = vpop.permute.xlu0 %240
    %242 = vrot.lane.b32.xlu0 %v181, 106
    %v243 = vpop.permute.xlu0 %242
    %vm244 = vcmask 867328
    %v245 = vsel %vm244, %v241, %v243
    %v248 = vld [vmem:[%s5] sm:$0xff]
    %v250 = vsel %vm124, %v248, 0
    %252 = vmatpush.msra.mxu0 0.0
    %253 = vmatpush.msra.mxu0 0.0
    %254 = vmatpush.msra.mxu0 0.0
    %255 = vmatpush.msra.mxu0 0.0
    %256 = vmatpush.msra.mxu0 0.0
    %257 = vmatpush.msra.mxu0 0.0
    %258 = vmatpush.msra.mxu0 0.0
    %259 = vmatpush.msra.mxu0 %v245
    %260 = vmatpush.msra.mxu0 %v237
    %261 = vmatpush.msra.mxu0 %v229
    %262 = vmatpush.msra.mxu0 %v221
    %263 = vmatpush.msra.mxu0 %v213
    %264 = vmatpush.msra.mxu0 %v205
    %265 = vmatpush.msra.mxu0 %v197
    %266 = vmatpush.msra.mxu0 %v189
    %267 = vmatpush.msra.mxu0 %v180
    %268 = vmatmul.f32.gmra.mxu0 %v250
    %v269 = vpop.f32.mrf.mxu0
    %v270 = vadd.f32 0.0, %v269
    %271 = vdwg.mxu0
    %272 = vmatpush.msra.mxu0 0.0
    %273 = vmatpush.msra.mxu0 0.0
    %274 = vmatpush.msra.mxu0 0.0
    %275 = vmatpush.msra.mxu0 0.0
    %276 = vmatpush.msra.mxu0 0.0
    %277 = vmatpush.msra.mxu0 0.0
    %278 = vmatpush.msra.mxu0 0.0
    %279 = vmatpush.msra.mxu0 %v243
    %280 = vmatpush.msra.mxu0 %v235
    %281 = vmatpush.msra.mxu0 %v227
    %282 = vmatpush.msra.mxu0 %v219
    %283 = vmatpush.msra.mxu0 %v211
    %284 = vmatpush.msra.mxu0 %v203
    %285 = vmatpush.msra.mxu0 %v195
    %286 = vmatpush.msra.mxu0 %v187
    %287 = vmatpush.msra.mxu0 %v181
    %288 = vmatmul.f32.gmra.mxu0 %v250
    %v289 = vpop.f32.mrf.mxu0
    %v290 = vadd.f32 0.0, %v289
    %291 = vdwg.mxu0
    %v292 = vld [vmem:[%s2] sm:$0x3]
    %v294 = vperm.slane %v292, 0
    %v295 = vperm.slane %v292, 1
    %v298 = vmul.f32 %v270, %v294
    %v299 = vmul.f32 %v290, %v295
    %v300 = vsel %vm124, %v299, 0.0
    %v301 = vadd.f32 %v298, %v300
    %302 = vadd.xlane.f32.xlu0 %v301
    %v303 = vpop.xlane.xlu0 %302
    %v304 = vmul.f32 %v303, 0.0078125
    %v305 = vsub.f32 %v270, %v304
    %v306 = vsub.f32 %v290, %v304
    %v307 = vmul.f32 %v305, %v294
    %v308 = vmul.f32 %v306, %v295
    %v309 = vmul.f32 %v307, %v307
    %v310 = vmul.f32 %v308, %v308
    %v311 = vsel %vm124, %v310, 0.0
    %v312 = vadd.f32 %v309, %v311
    %313 = vadd.xlane.f32.xlu0 %v312
    %v314 = vpop.xlane.xlu0 %313
    %v315 = vmul.f32 %v314, 0.0078125
    %v316 = vld [vmem:[%s8] sm:$0xff]
    %v317 = vadd.f32 %v315, 1e-05
    %v318 = vrsqrt.pop %v317
    %v319 = vmul.f32 %v318, %v317
    %v320 = vmul.f32 %v319, %v318
    %v321 = vmul.f32 0.5, %v320
    %v322 = vsub.f32 1.5, %v321
    %v323 = vmul.f32 %v318, %v322
    %vm324 = vweird.f32 %v317
    %vm325 = vweird.f32 %v318
    %vm326 = vmor %vm324, %vm325
    %v327 = vsel %vm326, %v318, %v323
    %v328 = vmul.f32 %v316, %v327
    %v329 = vld [vmem:[%s9] sm:$0xff]
    %v330 = vmul.f32 %v304, %v328
    %v331 = vsub.f32 %v329, %v330
    %333 = vset.pattern.permute.xlu0 0
    %334 = vperm.xlu0 %333, %v328
    %v335 = vpop.permute.xlu0 %334
    %v337 = vmul.f32 %v270, %v335
    %v338 = vmul.f32 %v290, %v335
    %340 = vset.pattern.permute.xlu0 0
    %341 = vperm.xlu0 %340, %v331
    %v342 = vpop.permute.xlu0 %341
    %v344 = vadd.f32 %v337, %v342
    %v345 = vadd.f32 %v338, %v342
    %v346 = vld [vmem:[%s4] sm:$0xff]
    %v347 = vld [vmem:[#allocation6] sm:$0xff]
    %v348 = vld [vmem:[#allocation6 + $0x8] sm:$0xff]
    %v349 = vld [vmem:[#allocation6 + $0x10] sm:$0xff]
    %v350 = vld [vmem:[#allocation6 + $0x18] sm:$0xff]
    %v351 = vld [vmem:[#allocation6 + $0x20] sm:$0xff]
    %v352 = vld [vmem:[#allocation6 + $0x28] sm:$0xff]
    %v353 = vld [vmem:[#allocation6 + $0x30] sm:$0x1]
    %v354 = vld [vmem:[#allocation6 + $0x38] sm:$0x1]
    %vm355 = vcmask 203776
    %v357 = vsel %vm355, %v346, 0
    %v360 = vsel %vm77, %v353, 0
    %v363 = vsel %vm77, %v354, 0
    %365 = vmatpush.msra.mxu0 0.0
    %366 = vmatpush.msra.mxu0 0.0
    %367 = vmatpush.msra.mxu0 0.0
    %368 = vmatpush.msra.mxu0 0.0
    %369 = vmatpush.msra.mxu0 0.0
    %370 = vmatpush.msra.mxu0 0.0
    %371 = vmatpush.msra.mxu0 0.0
    %372 = vmatpush.msra.mxu0 0.0
    %373 = vmatpush.msra.mxu0 0.0
    %374 = vmatpush.msra.mxu0 0.0
    %375 = vmatpush.msra.mxu0 0.0
    %376 = vmatpush.msra.mxu0 0.0
    %377 = vmatpush.msra.mxu0 %v360
    %378 = vmatpush.msra.mxu0 %v351
    %379 = vmatpush.msra.mxu0 %v349
    %380 = vmatpush.msra.mxu0 %v347
    %381 = vmatmul.f32.gmra.mxu0 %v357
    %v382 = vpop.f32.mrf.mxu0
    %v383 = vadd.f32 0.0, %v382
    %384 = vdwg.mxu0
    %385 = vmatpush.msra.mxu0 0.0
    %386 = vmatpush.msra.mxu0 0.0
    %387 = vmatpush.msra.mxu0 0.0
    %388 = vmatpush.msra.mxu0 0.0
    %389 = vmatpush.msra.mxu0 0.0
    %390 = vmatpush.msra.mxu0 0.0
    %391 = vmatpush.msra.mxu0 0.0
    %392 = vmatpush.msra.mxu0 0.0
    %393 = vmatpush.msra.mxu0 0.0
    %394 = vmatpush.msra.mxu0 0.0
    %395 = vmatpush.msra.mxu0 0.0
    %396 = vmatpush.msra.mxu0 0.0
    %397 = vmatpush.msra.mxu0 %v363
    %398 = vmatpush.msra.mxu0 %v352
    %399 = vmatpush.msra.mxu0 %v350
    %400 = vmatpush.msra.mxu0 %v348
    %401 = vmatmul.f32.gmra.mxu0 %v357
    %v402 = vpop.f32.mrf.mxu0
    %v403 = vadd.f32 0.0, %v402
    %404 = vdwg.mxu0
    %v405 = vadd.f32 %v344, %v383
    %v406 = vadd.f32 %v345, %v403
    %v407 = vmax.f32 %v405, 0.0
    %v408 = vmax.f32 %v406, 0.0
    %409 = vst [vmem:[#allocation8] sm:$0xff] %v407
    %410 = vst.msk [vmem:[#allocation8 + $0x8] sm:$0xff] %vm124, %v408
    // Predicated region
    $region50: #{tpu_custom_call.1} parent=1 // pred_check
      _
    $region51: #{tpu_custom_call.1} parent=1 // pred_check_branch
      %412 = sbr.rel (0) target = $region53
    $region52: #{tpu_custom_call.1} parent=1 // pred_region
      %414 = vsyncadd [#allocation5], 0
      %s416 = sshll.u32 [#allocation8], 4
      %s417 = int_to_ptr.vmem [resolvable:$true] %s416
      %s418 = sshll.u32 %s10, 4
      %s419 = int_to_ptr.hbm [resolvable:$true] %s418
      %421 = dma.vmem_to_hbm [thread:$0]  %s417, 256, %s419, [#allocation5]
    $region53: #{tpu_custom_call.1} parent=1 // pred_fallthru
      _
    // Predicated region
    $region54: #{tpu_custom_call.1} parent=1 // pred_check
      _
    $region55: #{tpu_custom_call.1} parent=1 // pred_check_branch
      %423 = sbr.rel (0) target = $region57
    $region56: #{tpu_custom_call.1} parent=1 // pred_region
      %425 = dma.done [#allocation5], 256
    $region57: #{tpu_custom_call.1} parent=1 // pred_fallthru
      _
    %426 = vsyncpa [#allocation4], 1
    %427 = vsyncpa [#allocation7], 1
    %428 = vsyncpa [#allocation5], 1

</llo_original>
